<compile_context>
chip_gen: v7x
topology: tpu7x:2x2x1
jax: 0.10.0
libtpu: 0.0.40
codegen_flags: <defaults>
</compile_context>

<pallas_src>
import math

import jax
import jax.numpy as jnp
from jax.experimental import pallas as pl
from jax.experimental.pallas import tpu as pltpu

_LANE_CANDIDATES = (1024, 512, 256, 128)  # wide-to-narrow, multiples of 128
_SINGLE_BLOCK_MAX_BYTES = 4 * 1024 * 1024  # small odd-row inputs: one full block


def _generation_params():
    """Per-TPU-generation (tile_bytes, vmem_limit_bytes, min_grid_steps)."""
    kind = ""
    try:
        kind = jax.devices()[0].device_kind.lower()
    except Exception:
        pass
    if "v7" in kind:
        # v7x: ~3.2 TB/s per TC but only 64 MiB VMEM/TC.  8 MiB tiles cut the
        # ~0.35 us per-step overhead to ~5% of the step; live buffers are
        # 2 arrays x 2 pipeline buffers x 8 MiB = 32 MiB, so raise the scoped
        # VMEM limit to 48 MiB.  min_grid=2 shards the parallel axis across
        # both TensorCores.
        return 8 << 20, 48 << 20, 2
    if "v6" in kind:
        # v6e: 4 MiB tiles -> 16 MiB live, under the 32 MiB default scoped VMEM.
        return 4 << 20, None, 1
    if "v5 lite" in kind or "v5e" in kind:
        # v5e: keep 2 MiB tiles (8 MiB live) under the 16 MiB default limit;
        # at 0.82 TB/s the per-step overhead is already only ~7%.
        return 2 << 20, None, 1
    if "v4" in kind or "v5" in kind:
        # v4 / v5p: megacore (2 TCs), plenty of VMEM.
        return 4 << 20, None, 2
    # Unknown generation: conservative defaults.
    return 2 << 20, None, 1


def _make_swish_kernel(beta: float):
    beta = float(beta)

    def kernel(x_ref, o_ref):
        # Compute in f32 (v5e has no bf16 VPU/EUP path); cast back on store.
        # Compute is fully hidden under the DMA pipeline, so exact sigmoid is
        # free; pl.reciprocal(approx=True) is available if VALU ever binds.
        xf = x_ref[...].astype(jnp.float32)
        z = xf if beta == 1.0 else beta * xf
        o_ref[...] = (xf * jax.nn.sigmoid(z)).astype(o_ref.dtype)

    return kernel


def swish(x: jax.Array, beta: float = 1.0, donate: bool = False) -> jax.Array:
    """Elementwise Swish via a Pallas TPU kernel (any shape / float dtype)."""
    orig_shape = x.shape
    dtype = x.dtype
    itemsize = jnp.dtype(dtype).itemsize
    # Sublane packing granularity: 8 rows for 4-byte, 16 for 2-byte, 32 for 1-byte.
    sub = {4: 8, 2: 16, 1: 32}.get(itemsize, 8)
    n = math.prod(orig_shape)

    if n == 0:
        return x

    tile_bytes, vmem_limit, min_grid = _generation_params()

    # Prefer the widest lane count such that rows is also a sublane multiple:
    # lane-dense DMA, no host-side pad/copy, and free choice of row tile.
    lanes = next((c for c in _LANE_CANDIDATES if n % (c * sub) == 0), None)
    if lanes is not None:
        rows = n // lanes
        row_tile = max(sub, (tile_bytes // (lanes * itemsize)) // sub * sub)
        row_tile = min(row_tile, rows)
        # On multi-TensorCore chips, keep >= min_grid parallel steps when the
        # input is big enough, so both cores get work.
        if min_grid > 1 and rows >= min_grid * sub:
            cap = max(sub, (rows // min_grid) // sub * sub)
            row_tile = min(row_tile, cap)
        grid = (pl.cdiv(rows, row_tile),)
    elif n % 128 == 0 and n * itemsize <= _SINGLE_BLOCK_MAX_BYTES:
        # Small, lane-aligned input whose row count is not a sublane multiple:
        # a single full-extent block (exempt from the (8,128) divisibility
        # rule when the block equals the array dims).
        lanes = next(c for c in _LANE_CANDIDATES if n % c == 0)
        rows = n // lanes
        row_tile = rows
        grid = (1,)
    else:
        # Ragged element count: a padded Pallas pass would cost ~3x the ideal
        # HBM traffic; XLA's fused elementwise swish is already at roofline.
        xf = x.astype(jnp.float32)
        return (xf * jax.nn.sigmoid(beta * xf)).astype(dtype)

    x2d = x.reshape(rows, lanes)

    out2d = pl.pallas_call(
        _make_swish_kernel(beta),
        out_shape=jax.ShapeDtypeStruct((rows, lanes), dtype),
        grid=grid,
        in_specs=[pl.BlockSpec((row_tile, lanes), lambda i: (i, 0))],
        out_specs=pl.BlockSpec((row_tile, lanes), lambda i: (i, 0)),
        input_output_aliases=({0: 0} if donate else {}),
        compiler_params=pltpu.CompilerParams(
            dimension_semantics=("parallel",),
            vmem_limit_bytes=vmem_limit,
        ),
    )(x2d)

    return out2d.reshape(orig_shape)


def _ref_swish(x, beta=1.0):
    xf = x.astype(jnp.float32)
    return (xf * jax.nn.sigmoid(beta * xf)).astype(x.dtype)


if __name__ == "__main__":
    key = jax.random.PRNGKey(0)

    # 1) Small NCHW activation (aligned Pallas path, single lane-dense block).
    x1 = jax.random.normal(key, (2, 4, 16, 16), dtype=jnp.float32)
    y1 = jax.block_until_ready(swish(x1, beta=1.0))
    assert y1.shape == x1.shape and y1.dtype == x1.dtype
    assert jnp.allclose(y1, _ref_swish(x1), atol=1e-6, rtol=1e-6)

    # 2) Ragged element count (fused-jnp fallback path, no extra HBM passes).
    x2 = jax.random.normal(jax.random.fold_in(key, 1), (3, 5, 7, 11), dtype=jnp.float32)
    y2 = jax.block_until_ready(swish(x2, beta=1.0))
    assert y2.shape == x2.shape and y2.dtype == x2.dtype
    assert jnp.allclose(y2, _ref_swish(x2), atol=1e-6, rtol=1e-6)

    # 3) Larger aligned input: multi-step pipelined grid on every generation.
    x3 = jax.random.normal(jax.random.fold_in(key, 2), (8, 32, 128, 64), dtype=jnp.float32)
    y3 = jax.block_until_ready(swish(x3, beta=1.0))
    assert y3.shape == x3.shape and y3.dtype == x3.dtype
    assert jnp.allclose(y3, _ref_swish(x3), atol=1e-6, rtol=1e-6)

    # 4) bf16 activation (f32 compute in-kernel, cast back on store).
    x4 = jax.random.normal(jax.random.fold_in(key, 3), (2, 8, 64, 64), dtype=jnp.bfloat16)
    y4 = jax.block_until_ready(swish(x4, beta=1.0))
    assert y4.shape == x4.shape and y4.dtype == jnp.bfloat16
    assert jnp.allclose(y4.astype(jnp.float32), _ref_swish(x4).astype(jnp.float32),
                        atol=2e-2, rtol=2e-2)

    print("KERNEL_OK")
</pallas_src>

<mosaic_0001>
module attributes {stable_mosaic.version = 11 : i64} {
  func.func @kernel(%arg0: i32, %arg1: memref<8x256xf32, #tpu.memory_space<vmem>>, %arg2: memref<8x256xf32, #tpu.memory_space<vmem>>) attributes {dimension_semantics = [#tpu.dimension_semantics<parallel>], iteration_bounds = array<i64: 1>, scalar_prefetch = 0 : i64, scratch_operands = 0 : i64, tpu.core_type = #tpu.core_type<tc>, window_params = [{transform_indices = @transform_0, window_bounds = array<i64: 8, 256>}, {transform_indices = @transform_1, window_bounds = array<i64: 8, 256>}]} {
    %c0 = arith.constant 0 : index
    %c0_0 = arith.constant 0 : index
    %0 = vector.load %arg1[%c0, %c0_0] : memref<8x256xf32, #tpu.memory_space<vmem>>, vector<8x256xf32>
    %1 = arith.negf %0 : vector<8x256xf32>
    %2 = math.exp %1 : vector<8x256xf32>
    %cst = arith.constant 1.000000e+00 : f32
    %3 = vector.broadcast %cst : f32 to vector<8x256xf32>
    %4 = arith.addf %3, %2 : vector<8x256xf32>
    %5 = arith.divf %3, %4 : vector<8x256xf32>
    %6 = arith.mulf %0, %5 : vector<8x256xf32>
    %c0_1 = arith.constant 0 : index
    %c0_2 = arith.constant 0 : index
    %7 = vector.load %arg2[%c0_1, %c0_2] : memref<8x256xf32, #tpu.memory_space<vmem>>, vector<8x256xf32>
    tpu.vector_store %arg2[%c0_1, %c0_2], %6 {strides = array<i32>} : memref<8x256xf32, #tpu.memory_space<vmem>>, vector<8x256xf32>,
    return
  }
  func.func @transform_0(%arg0: i32) -> (i32, i32) {
    %c0_i32 = arith.constant 0 : i32
    %c0_i32_0 = arith.constant 0 : i32
    return %arg0, %c0_i32 : i32, i32
  }
  func.func @transform_1(%arg0: i32) -> (i32, i32) {
    %c0_i32 = arith.constant 0 : i32
    %c0_i32_0 = arith.constant 0 : i32
    return %arg0, %c0_i32 : i32, i32
  }
}

</mosaic_0001>

<llo_original>
// kernel: tpu_custom_call.1
$region0: #{tpu_custom_call.1}
  #allocation0 [shape = 'u32[]', space=smem, size = 0x4, offset = 0x4, fixed_abs, tag = 'smem constant byte address 0x4 - core index']
  #allocation1 [shape = 'u32[144,128]{1,0:T(1,128)}', space=vmem, size = 0x12000, scoped, tag = 'internal scratch']
  %s0 = inlined_call_operand.hbm [shape: f32[8,256], index: 0, kind: input, shape index: {}]
  %s1 = inlined_call_operand.hbm [shape: f32[8,256], index: 1, kind: output, shape index: {}]
  %s2 = sld [smem:[#allocation0]]
  $region18: #{tpu_custom_call.1} parent=0
    _
  %s4 = ssub.s32 1, %s2
  %s5 = scalar_select 0, %s4, %s2
  $region1: #{tpu_custom_call.1} parent=0
    #allocation2 [shape = 'u8[8192]{0}', space=vmem, size = 0x2000, scoped, tag = 'input window, operand 0, single buffered']
    #allocation3 [shape = 's32[1]{0}', space=sflag, size = 0x4, scoped, tag = 'scoped memory for tpu_custom_call.1']
    #allocation4 [shape = 's32[1]{0}', space=sflag, size = 0x4, scoped, tag = 'scoped memory for tpu_custom_call.1']
    #allocation5 [shape = 'u8[8192]{0}', space=vmem, size = 0x2000, scoped, tag = 'output window, operand 0, single buffered']
    %6 = vsyncpa [#allocation3], 0
    %7 = vsyncpa [#allocation4], 0
    // Predicated region
    $region2: #{tpu_custom_call.1} parent=1 // pred_check
      _
    $region3: #{tpu_custom_call.1} parent=1 // pred_check_branch
      %9 = sbr.rel (0) target = $region5
    $region4: #{tpu_custom_call.1} parent=1 // pred_region
      %s11 = ssub.s32 256, 256
      %12 = vsyncadd [#allocation3], %s11
      %s14 = sshll.u32 [#allocation2], 4
      %s15 = int_to_ptr.vmem [resolvable:$true] %s14
      %17 = dma.hbm_to_vmem [thread:$0]  %s0, 256, %s15, [#allocation3]
    $region5: #{tpu_custom_call.1} parent=1 // pred_fallthru
      _
    // Predicated region
    $region6: #{tpu_custom_call.1} parent=1 // pred_check
      _
    $region7: #{tpu_custom_call.1} parent=1 // pred_check_branch
      %19 = sbr.rel (0) target = $region9
    $region8: #{tpu_custom_call.1} parent=1 // pred_region
      %20 = dma.done [#allocation3], 256
    $region9: #{tpu_custom_call.1} parent=1 // pred_fallthru
      _
    %v21 = vld [vmem:[#allocation2] sm:$0xff]
    %v22 = vld [vmem:[#allocation2 + $0x8] sm:$0xff]
    %v23 = vxor.u32 %v21, 2147483648
    %v24 = vxor.u32 %v22, 2147483648
    %v25 = vmul.f32 %v23, 1.442695
    %v26 = vpow.pop %v25
    %v27 = vmul.f32 %v24, 1.442695
    %v28 = vpow.pop %v27
    %v29 = vadd.f32 %v26, 1.0
    %v30 = vadd.f32 %v28, 1.0
    %v31 = vrcp.pop %v29
    %v32 = vmul.f32 1.0, %v31
    %v33 = vrcp.pop %v30
    %v34 = vmul.f32 1.0, %v33
    %v35 = vmul.f32 %v21, %v32
    %v36 = vmul.f32 %v22, %v34
    %37 = vst [vmem:[#allocation5] sm:$0xff] %v35
    %38 = vst [vmem:[#allocation5 + $0x8] sm:$0xff] %v36
    // Predicated region
    $region10: #{tpu_custom_call.1} parent=1 // pred_check
      _
    $region11: #{tpu_custom_call.1} parent=1 // pred_check_branch
      %40 = sbr.rel (0) target = $region13
    $region12: #{tpu_custom_call.1} parent=1 // pred_region
      %s42 = ssub.s32 256, 256
      %43 = vsyncadd [#allocation4], %s42
      %s45 = sshll.u32 [#allocation5], 4
      %s46 = int_to_ptr.vmem [resolvable:$true] %s45
      %48 = dma.vmem_to_hbm [thread:$0]  %s46, 256, %s1, [#allocation4]
    $region13: #{tpu_custom_call.1} parent=1 // pred_fallthru
      _
    // Predicated region
    $region14: #{tpu_custom_call.1} parent=1 // pred_check
      _
    $region15: #{tpu_custom_call.1} parent=1 // pred_check_branch
      %50 = sbr.rel (0) target = $region17
    $region16: #{tpu_custom_call.1} parent=1 // pred_region
      %51 = dma.done [#allocation4], 256
    $region17: #{tpu_custom_call.1} parent=1 // pred_fallthru
      _
    %52 = vsyncpa [#allocation3], 1
    %53 = vsyncpa [#allocation4], 1

</llo_original>
